<compile_context>
chip_gen: v5e
topology: v5e:2x2
jax: 0.10.0
libtpu: 0.0.40
codegen_flags: <defaults>
</compile_context>

<pallas_src>
import functools

import jax
import jax.numpy as jnp
from jax.experimental import pallas as pl
from jax.experimental.pallas import tpu as pltpu


def _focal_loss_kernel(logits_ref, tgt_ref, out_ref, *, alpha, gamma,
                       ignore_index, tile_p, num_pixels, mask_tail):
    # logits_ref: (1, C, TILE_P) float; tgt_ref: (1, 1, TILE_P) int32
    # out_ref:    (1, 1, 1, 128) float32 -- per-tile partial sum in lane 0.
    logits = logits_ref[0].astype(jnp.float32)               # (C, TILE_P)
    tgt = tgt_ref[0]                                          # (1, TILE_P) int32

    # Numerically stable log-sum-exp over the class (sublane) axis.
    m = jnp.max(logits, axis=0, keepdims=True)                # (1, TILE_P)
    lse = jnp.log(jnp.sum(jnp.exp(logits - m), axis=0, keepdims=True)) + m

    # Gather the target-class logit with a compare+select (no per-pixel gather,
    # no extra float multiply).
    cls = jax.lax.broadcasted_iota(jnp.int32, logits.shape, 0)     # (C, TILE_P)
    tgt_logit = jnp.sum(jnp.where(cls == tgt, logits, 0.0),
                        axis=0, keepdims=True)                # (1, TILE_P)

    ce = lse - tgt_logit                                      # per-pixel CE >= 0

    valid = tgt != ignore_index                               # (1, TILE_P) bool
    if mask_tail:
        pix = (pl.program_id(1) * tile_p
               + jax.lax.broadcasted_iota(jnp.int32, tgt.shape, 1))
        valid = valid & (pix < num_pixels)
    # Select kills any garbage/NaN from ignored pixels or out-of-range tail.
    ce = jnp.where(valid, ce, 0.0)

    g = float(gamma)
    if g == 0.0:
        # (1-pt)**0 == 1 -> no exp needed at all for the module default.
        focal = ce
    else:
        pt = jnp.exp(-ce)
        q = jnp.maximum(1.0 - pt, 0.0)                        # clamp fp slop
        if g == int(g) and 0 < int(g) <= 8:
            modulator = q
            for _ in range(int(g) - 1):                       # explicit multiplies
                modulator = modulator * q
        else:
            modulator = jnp.power(q, g)                       # generic fallback
        focal = jnp.where(valid, modulator * ce, 0.0)

    # One scalar partial per grid step (alpha applied once, not per pixel);
    # write it into lane 0 of a 128-lane row (unmasked lane-dense store).
    s = jnp.sum(focal) * alpha
    lane = jax.lax.broadcasted_iota(jnp.int32, (1, 128), 1)
    out_ref[0, 0] = jnp.where(lane == 0, s, 0.0)


def _choose_tile_p(C, P, itemsize):
    # Keep one (double-buffered) logits tile well under the default scoped-VMEM
    # limit on every generation (incl. v7x: 32 MiB scoped of 64 MiB physical).
    budget_per_buffer = 6 * 1024 * 1024
    tp = budget_per_buffer // max(1, C * itemsize)
    tp = min(tp, 8192)
    tp = max(128, (tp // 128) * 128)
    if P <= tp:
        return P          # one tile spans the whole pixel axis (full-dim block)
    return tp


def focal_loss(inputs, targets, *, alpha=1.0, gamma=0.0, size_average=True,
               ignore_index=255):
    """inputs: (N, C, H, W) float logits; targets: (N, H, W) int class ids."""
    N, C, H, W = inputs.shape
    P = H * W
    R = N * P

    # NCHW already has pixels contiguous last -> reshape is a view, no HBM work.
    logits = inputs.reshape(N, C, P)               # classes=sublanes, pixels=lanes
    tgt = targets.reshape(N, 1, P).astype(jnp.int32)

    tile_p = _choose_tile_p(C, P, logits.dtype.itemsize)
    p_tiles = pl.cdiv(P, tile_p)
    mask_tail = (P % tile_p) != 0

    kernel = functools.partial(
        _focal_loss_kernel,
        alpha=float(alpha), gamma=float(gamma), ignore_index=int(ignore_index),
        tile_p=tile_p, num_pixels=P, mask_tail=mask_tail)

    partials = pl.pallas_call(
        kernel,
        out_shape=jax.ShapeDtypeStruct((N, p_tiles, 1, 128), jnp.float32),
        grid_spec=pltpu.PrefetchScalarGridSpec(
            num_scalar_prefetch=0,
            grid=(N, p_tiles),
            in_specs=[
                pl.BlockSpec((1, C, tile_p), lambda n, p: (n, 0, p)),
                pl.BlockSpec((1, 1, tile_p), lambda n, p: (n, 0, p)),
            ],
            out_specs=pl.BlockSpec((1, 1, 1, 128), lambda n, p: (n, p, 0, 0)),
        ),
        compiler_params=pltpu.CompilerParams(
            dimension_semantics=("parallel", "parallel")),
    )(logits, tgt)

    total = jnp.sum(partials)                      # tiny per-tile-partials array
    if size_average:
        # PyTorch: reduction='none' then .mean() -> mean over ALL N*H*W pixels
        # (ignored pixels contribute 0 but still count in the denominator).
        return total / jnp.float32(R)
    return total


def _reference_focal_loss(inputs, targets, *, alpha, gamma, ignore_index,
                          size_average=True):
    """Plain-JAX reference matching the PyTorch semantics."""
    N, C, H, W = inputs.shape
    logits = jnp.transpose(inputs, (0, 2, 3, 1)).reshape(-1, C).astype(jnp.float32)
    tgt = targets.reshape(-1).astype(jnp.int32)
    lse = jax.scipy.special.logsumexp(logits, axis=-1)
    safe_tgt = jnp.where(tgt == ignore_index, 0, tgt)
    tgt_logit = jnp.take_along_axis(logits, safe_tgt[:, None], axis=-1)[:, 0]
    ce = lse - tgt_logit
    valid = tgt != ignore_index
    ce = jnp.where(valid, ce, 0.0)
    pt = jnp.exp(-ce)
    focal = alpha * jnp.power(1.0 - pt, gamma) * ce
    focal = jnp.where(valid, focal, 0.0)
    return jnp.mean(focal) if size_average else jnp.sum(focal)


if __name__ == "__main__":
    key = jax.random.PRNGKey(0)
    k1, k2, k3 = jax.random.split(key, 3)

    N, C, H, W = 2, 4, 16, 16
    inputs = jax.random.normal(k1, (N, C, H, W), dtype=jnp.float32)
    targets = jax.random.randint(k2, (N, H, W), 0, C, dtype=jnp.int32)
    # sprinkle in some ignored pixels
    ignore_mask = jax.random.bernoulli(k3, 0.1, (N, H, W))
    targets = jnp.where(ignore_mask, jnp.int32(255), targets)

    # exercise the module default (gamma=0, exp-free path), the specialized
    # integer-pow path, and size_average=False
    for alpha, gamma, size_average in ((1.0, 0.0, True), (0.25, 2.0, True),
                                       (1.0, 2.0, False)):
        out = focal_loss(inputs, targets, alpha=alpha, gamma=gamma,
                         size_average=size_average, ignore_index=255)
        out = jax.block_until_ready(out)
        ref = _reference_focal_loss(inputs, targets, alpha=alpha, gamma=gamma,
                                    ignore_index=255, size_average=size_average)
        assert jnp.allclose(out, ref, rtol=1e-5, atol=1e-6), (
            alpha, gamma, size_average, out, ref)

    print("KERNEL_OK")
</pallas_src>

<mosaic_0001>
module attributes {stable_mosaic.version = 11 : i64} {
  func.func @_focal_loss_kernel(%arg0: i32, %arg1: i32, %arg2: memref<1x4x256xf32, #tpu.memory_space<vmem>>, %arg3: memref<1x1x256xi32, #tpu.memory_space<vmem>>, %arg4: memref<1x1x1x128xf32, #tpu.memory_space<vmem>>) attributes {dimension_semantics = [#tpu.dimension_semantics<parallel>, #tpu.dimension_semantics<parallel>], iteration_bounds = array<i64: 2, 1>, scalar_prefetch = 0 : i64, scratch_operands = 0 : i64, tpu.core_type = #tpu.core_type<tc>, window_params = [{transform_indices = @transform_0, window_bounds = array<i64: 1, 4, 256>}, {transform_indices = @transform_1, window_bounds = array<i64: 1, 1, 256>}, {transform_indices = @transform_2, window_bounds = array<i64: 1, 1, 1, 128>}]} {
    %c0 = arith.constant 0 : index
    %c0_0 = arith.constant 0 : index
    %c0_1 = arith.constant 0 : index
    %0 = vector.load %arg2[%c0, %c0_0, %c0_1] : memref<1x4x256xf32, #tpu.memory_space<vmem>>, vector<1x4x256xf32>
    %1 = vector.shape_cast %0 : vector<1x4x256xf32> to vector<4x256xf32>
    %c0_2 = arith.constant 0 : index
    %c0_3 = arith.constant 0 : index
    %c0_4 = arith.constant 0 : index
    %2 = vector.load %arg3[%c0_2, %c0_3, %c0_4] : memref<1x1x256xi32, #tpu.memory_space<vmem>>, vector<1x1x256xi32>
    %3 = vector.shape_cast %2 : vector<1x1x256xi32> to vector<1x256xi32>
    %cst = arith.constant dense<0xFF800000> : vector<256xf32>
    %4 = vector.multi_reduction <maximumf>, %1, %cst [0] : vector<4x256xf32> to vector<256xf32>
    %5 = vector.shape_cast %4 : vector<256xf32> to vector<1x256xf32>
    %6 = vector.broadcast %5 : vector<1x256xf32> to vector<4x256xf32>
    %7 = arith.subf %1, %6 : vector<4x256xf32>
    %8 = math.exp %7 : vector<4x256xf32>
    %cst_5 = arith.constant dense<0.000000e+00> : vector<256xf32>
    %9 = vector.multi_reduction <add>, %8, %cst_5 [0] : vector<4x256xf32> to vector<256xf32>
    %10 = vector.shape_cast %9 : vector<256xf32> to vector<1x256xf32>
    %11 = math.log %10 : vector<1x256xf32>
    %12 = arith.addf %11, %5 : vector<1x256xf32>
    %13 = tpu.iota {dimensions = array<i32: 0>} : vector<4x256xi32>
    %14 = vector.broadcast %3 : vector<1x256xi32> to vector<4x256xi32>
    %15 = arith.cmpi eq, %13, %14 : vector<4x256xi32>
    %cst_6 = arith.constant 0.000000e+00 : f32
    %16 = vector.broadcast %cst_6 : f32 to vector<4x256xf32>
    %17 = arith.select %15, %1, %16 : vector<4x256xi1>, vector<4x256xf32>
    %cst_7 = arith.constant dense<0.000000e+00> : vector<256xf32>
    %18 = vector.multi_reduction <add>, %17, %cst_7 [0] : vector<4x256xf32> to vector<256xf32>
    %19 = vector.shape_cast %18 : vector<256xf32> to vector<1x256xf32>
    %20 = arith.subf %12, %19 : vector<1x256xf32>
    %c255_i32 = arith.constant 255 : i32
    %21 = vector.broadcast %c255_i32 : i32 to vector<1x256xi32>
    %22 = arith.cmpi ne, %3, %21 : vector<1x256xi32>
    %cst_8 = arith.constant 0.000000e+00 : f32
    %23 = vector.broadcast %cst_8 : f32 to vector<1x256xf32>
    %24 = arith.select %22, %20, %23 : vector<1x256xi1>, vector<1x256xf32>
    %25 = vector.shape_cast %24 : vector<1x256xf32> to vector<1x1x256xf32>
    %cst_9 = arith.constant dense<0.000000e+00> : vector<1xf32>
    %26 = vector.multi_reduction <add>, %25, %cst_9 [1, 2] : vector<1x1x256xf32> to vector<1xf32>
    %27 = vector.shape_cast %26 : vector<1xf32> to vector<1x1x1xf32>
    %28 = vector.extract %27[0, 0, 0] : f32 from vector<1x1x1xf32>
    %cst_10 = arith.constant 1.000000e+00 : f32
    %29 = arith.mulf %28, %cst_10 : f32
    %30 = tpu.iota {dimensions = array<i32: 1>} : vector<1x128xi32>
    %c0_i32 = arith.constant 0 : i32
    %31 = vector.broadcast %c0_i32 : i32 to vector<1x128xi32>
    %32 = arith.cmpi eq, %30, %31 : vector<1x128xi32>
    %cst_11 = arith.constant 0.000000e+00 : f32
    %33 = vector.broadcast %29 : f32 to vector<1x128xf32>
    %34 = vector.broadcast %cst_11 : f32 to vector<1x128xf32>
    %35 = arith.select %32, %33, %34 : vector<1x128xi1>, vector<1x128xf32>
    %c0_12 = arith.constant 0 : index
    %c0_13 = arith.constant 0 : index
    %c0_14 = arith.constant 0 : index
    %c0_15 = arith.constant 0 : index
    %36 = vector.load %arg4[%c0_12, %c0_13, %c0_14, %c0_15] : memref<1x1x1x128xf32, #tpu.memory_space<vmem>>, vector<1x1x1x128xf32>
    %37 = vector.shape_cast %36 : vector<1x1x1x128xf32> to vector<1x128xf32>
    %38 = vector.shape_cast %35 : vector<1x128xf32> to vector<1x1x1x128xf32>
    tpu.vector_store %arg4[%c0_12, %c0_13, %c0_14, %c0_15], %38 {strides = array<i32>} : memref<1x1x1x128xf32, #tpu.memory_space<vmem>>, vector<1x1x1x128xf32>,
    return
  }
  func.func @transform_0(%arg0: i32, %arg1: i32) -> (i32, i32, i32) {
    %c0_i32 = arith.constant 0 : i32
    %c0_i32_0 = arith.constant 0 : i32
    return %arg0, %c0_i32, %arg1 : i32, i32, i32
  }
  func.func @transform_1(%arg0: i32, %arg1: i32) -> (i32, i32, i32) {
    %c0_i32 = arith.constant 0 : i32
    %c0_i32_0 = arith.constant 0 : i32
    return %arg0, %c0_i32, %arg1 : i32, i32, i32
  }
  func.func @transform_2(%arg0: i32, %arg1: i32) -> (i32, i32, i32, i32) {
    %c0_i32 = arith.constant 0 : i32
    %c0_i32_0 = arith.constant 0 : i32
    %c0_i32_1 = arith.constant 0 : i32
    return %arg0, %arg1, %c0_i32, %c0_i32_0 : i32, i32, i32, i32
  }
}

</mosaic_0001>

<llo_original>
// kernel: tpu_custom_call.1
$region0: #{tpu_custom_call.1}
  #allocation0 [shape = 'u32[]', space=smem, size = 0x4, offset = 0x4, fixed_abs, tag = 'smem constant byte address 0x4 - core index']
  #allocation1 [shape = 'u32[72,128]{1,0:T(1,128)}', space=vmem, size = 0x9000, scoped, tag = 'internal scratch']
  %s0 = inlined_call_operand.hbm [shape: f32[2,4,256], index: 0, kind: input, shape index: {}]
  %s1 = inlined_call_operand.hbm [shape: s32[2,1,256], index: 1, kind: input, shape index: {}]
  %s2 = inlined_call_operand.hbm [shape: f32[2,1,1,128], index: 2, kind: output, shape index: {}]
  %s3 = sld [smem:[#allocation0]]
  $region49: #{tpu_custom_call.1} parent=0
    _
  %s5 = ssub.s32 1, %s3
  %s6 = scalar_select 0, %s5, %s3
  $region1: #{tpu_custom_call.1} parent=0
    #allocation2 [shape = 'u8[8192]{0}', space=vmem, size = 0x2000, scoped, tag = 'input window, operand 0']
    #allocation3 [shape = 's32[2]{0}', space=sflag, size = 0x8, scoped, tag = 'scoped memory for tpu_custom_call.1']
    #allocation4 [shape = 's32[2]{0}', space=sflag, size = 0x8, scoped, tag = 'scoped memory for tpu_custom_call.1']
    #allocation5 [shape = 'u8[2048]{0}', space=vmem, size = 0x800, scoped, tag = 'input window, operand 1']
    #allocation6 [shape = 's32[2]{0}', space=sflag, size = 0x8, scoped, tag = 'scoped memory for tpu_custom_call.1']
    #allocation7 [shape = 'u8[1024]{0}', space=vmem, size = 0x400, scoped, tag = 'output window, operand 0']
    %7 = vsyncpa [#allocation3], 0
    %s8 = scalar_lea.sflag [#allocation3], 1
    %9 = vsyncpa %s8, 0
    %10 = vsyncpa [#allocation6], 0
    %s11 = scalar_lea.sflag [#allocation6], 1
    %12 = vsyncpa %s11, 0
    %13 = vsyncpa [#allocation4], 0
    %s14 = scalar_lea.sflag [#allocation4], 1
    %15 = vsyncpa %s14, 0
    loop: start=0, step=1, limit=4
    $region2: #{tpu_custom_call.1} parent=1 // loop_pre_header
      _
    $region3: #{tpu_custom_call.1} parent=1 // loop_header
      %s17 = sphi 0, %s21
      %p18 = scmp.ge.s32.totalorder %s17, 4
      %s24 = sphi 0, %s36
      %s25 = sphi 0, %s32
      %s26 = sphi 0, %s24
      %s27 = sphi 0, %s25
      %s28 = sphi 0, %s26
      %s29 = sphi 0, %s27
      %s41 = sphi 0, %s43
      %s44 = sphi 0, %s41
      %s45 = sphi 0, %s44
      %s61 = sphi 0, %s45
      %s69 = sphi 0, %s71
      %s72 = sphi 0, %s69
      %s73 = sphi 0, %s72
      %s89 = sphi 0, %s73
      %s97 = sphi 0, %s99
      %s100 = sphi 0, %s97
      %s101 = sphi 0, %s100
      %s117 = sphi 0, %s101
    $region4: #{tpu_custom_call.1} parent=1 // loop_header_branch
      %20 = sbr.rel (%p18) target = $region8
    $region5: #{tpu_custom_call.1} parent=1 // loop_body
      %s22 = ssub.s32 %s17, 1
      %s23 = ssub.s32 %s17, 2
      %s30 = sadd.s32 1, %s25
      %p31 = scmp.ge.s32.totalorder %s30, 1
      %s32 = scalar_select %p31, 0, %s30
      %s33 = sadd.s32 1, %s24
      %s34 = scalar_select %p31, %s33, %s24
      %p35 = scmp.ge.s32.totalorder %s34, 2
      %s36 = scalar_select %p35, 0, %s34
      %s37 = ssub.s32 %s24, %s36
      %s38 = ssub.s32 %s25, %s32
      %s39 = sor.u32 %s37, %s38
      %p40 = scmp.eq.s32.totalorder %s39, 0
      %s42 = sadd.s32 %s41, 1
      %s43 = scalar_select %p40, %s41, %s42
      %p46 = pneg %p40
      %p47 = scmp.eq.s32.totalorder %s17, 1
      %p48 = por %p46, %p47
      %p49 = scmp.ne.s32.totalorder %s41, %s44
      %p50 = scmp.eq.s32.totalorder %s17, 0
      %p51 = por %p49, %p50
      %p52 = scmp.ne.s32.totalorder %s41, %s44
      %p53 = scmp.eq.s32.totalorder %s22, 1
      %p54 = por %p52, %p53
      %p55 = scmp.ne.s32.totalorder %s44, %s45
      %p56 = scmp.eq.s32.totalorder %s22, 0
      %p57 = por %p55, %p56
      %p58 = scmp.ne.s32.totalorder %s44, %s45
      %p59 = scmp.eq.s32.totalorder %s23, 1
      %p60 = por %p58, %p59
      %p62 = scmp.ne.s32.totalorder %s45, %s61
      %p63 = scmp.eq.s32.totalorder %s23, 0
      %p64 = por %p62, %p63
      %s65 = ssub.s32 %s24, %s36
      %s66 = ssub.s32 %s25, %s32
      %s67 = sor.u32 %s65, %s66
      %p68 = scmp.eq.s32.totalorder %s67, 0
      %s70 = sadd.s32 %s69, 1
      %s71 = scalar_select %p68, %s69, %s70
      %p74 = pneg %p68
      %p75 = scmp.eq.s32.totalorder %s17, 1
      %p76 = por %p74, %p75
      %p77 = scmp.ne.s32.totalorder %s69, %s72
      %p78 = scmp.eq.s32.totalorder %s17, 0
      %p79 = por %p77, %p78
      %p80 = scmp.ne.s32.totalorder %s69, %s72
      %p81 = scmp.eq.s32.totalorder %s22, 1
      %p82 = por %p80, %p81
      %p83 = scmp.ne.s32.totalorder %s72, %s73
      %p84 = scmp.eq.s32.totalorder %s22, 0
      %p85 = por %p83, %p84
      %p86 = scmp.ne.s32.totalorder %s72, %s73
      %p87 = scmp.eq.s32.totalorder %s23, 1
      %p88 = por %p86, %p87
      %p90 = scmp.ne.s32.totalorder %s73, %s89
      %p91 = scmp.eq.s32.totalorder %s23, 0
      %p92 = por %p90, %p91
      %s93 = ssub.s32 %s24, %s36
      %s94 = ssub.s32 %s25, %s32
      %s95 = sor.u32 %s93, %s94
      %p96 = scmp.eq.s32.totalorder %s95, 0
      %s98 = sadd.s32 %s97, 1
      %s99 = scalar_select %p96, %s97, %s98
      %p102 = pneg %p96
      %p103 = scmp.eq.s32.totalorder %s17, 1
      %p104 = por %p102, %p103
      %p105 = scmp.ne.s32.totalorder %s97, %s100
      %p106 = scmp.eq.s32.totalorder %s17, 0
      %p107 = por %p105, %p106
      %p108 = scmp.ne.s32.totalorder %s97, %s100
      %p109 = scmp.eq.s32.totalorder %s22, 1
      %p110 = por %p108, %p109
      %p111 = scmp.ne.s32.totalorder %s100, %s101
      %p112 = scmp.eq.s32.totalorder %s22, 0
      %p113 = por %p111, %p112
      %p114 = scmp.ne.s32.totalorder %s100, %s101
      %p115 = scmp.eq.s32.totalorder %s23, 1
      %p116 = por %p114, %p115
      %p118 = scmp.ne.s32.totalorder %s101, %s117
      %p119 = scmp.eq.s32.totalorder %s23, 0
      %p120 = por %p118, %p119
      %p121 = scmp.le.s32.totalorder 1, %s17
      %p122 = scmp.lt.s32.totalorder %s17, 3
      %p123 = pnand %p121, %p122
      %p124 = pneg %p123
      // Predicated region
      $region9: #{tpu_custom_call.1} parent=5 // pred_check
        _
      $region10: #{tpu_custom_call.1} parent=5 // pred_check_branch
        %126 = sbr.rel (%p123) target = $region12
      $region11: #{tpu_custom_call.1} parent=5 // pred_region
        %s127 = ssub.s32 %s17, 1
      $region12: #{tpu_custom_call.1} parent=5 // pred_fallthru
        _
      %p128 = scmp.lt.s32.totalorder %s17, 2
      // Predicated region
      $region13: #{tpu_custom_call.1} parent=5 // pred_check
        %p129 = pneg %p128
      $region14: #{tpu_custom_call.1} parent=5 // pred_check_branch
        %131 = sbr.rel (%p129) target = $region16
      $region15: #{tpu_custom_call.1} parent=5 // pred_region
        // Predicated region
        $region17: #{tpu_custom_call.1} parent=15 // pred_check
          %p132 = pneg %p51
        $region18: #{tpu_custom_call.1} parent=15 // pred_check_branch
          %134 = sbr.rel (%p132) target = $region20
        $region19: #{tpu_custom_call.1} parent=15 // pred_region
          %s135 = sand.u32 %s41, 1
          %s136 = scalar_lea.sflag [#allocation3], %s135
          %s137 = sand.u32 %s41, 1
          %s138 = smul.addr %s137, 8
          %s139 = scalar_lea.vmem [#allocation2], %s138
          %s140 = smul.u32 2, %s25
          %142 = vsyncadd %s136, 0
          %s143 = smul.addr %s24, 2
          %s144 = sadd.s32 %s140, %s143
          %s145 = smul.addr %s144, 4
          %s146 = scalar_lea.hbm %s0, %s145
          %s148 = sshll.u32 %s146, 4
          %s149 = int_to_ptr.hbm [resolvable:$true] %s148
          %s150 = sshll.u32 %s139, 4
          %s151 = int_to_ptr.vmem [resolvable:$true] %s150
          %153 = dma.hbm_to_vmem [thread:$0]  %s149, 128, %s151, %s136
        $region20: #{tpu_custom_call.1} parent=15 // pred_fallthru
          _
        // Predicated region
        $region21: #{tpu_custom_call.1} parent=15 // pred_check
          %p154 = pneg %p79
        $region22: #{tpu_custom_call.1} parent=15 // pred_check_branch
          %156 = sbr.rel (%p154) target = $region24
        $region23: #{tpu_custom_call.1} parent=15 // pred_region
          %s157 = sand.u32 %s69, 1
          %s158 = scalar_lea.sflag [#allocation6], %s157
          %s159 = sand.u32 %s69, 1
          %s160 = smul.addr %s159, 2
          %s161 = scalar_lea.vmem [#allocation5], %s160
          %s162 = smul.u32 2, %s25
          %164 = vsyncadd %s158, 0
          %s165 = smul.addr %s24, 2
          %s166 = sadd.s32 %s162, %s165
          %s167 = scalar_lea.hbm %s1, %s166
          %s169 = sshll.u32 %s167, 4
          %s170 = int_to_ptr.hbm [resolvable:$true] %s169
          %s171 = sshll.u32 %s161, 4
          %s172 = int_to_ptr.vmem [resolvable:$true] %s171
          %174 = dma.hbm_to_vmem [thread:$0]  %s170, 32, %s172, %s158
        $region24: #{tpu_custom_call.1} parent=15 // pred_fallthru
          _
      $region16: #{tpu_custom_call.1} parent=5 // pred_fallthru
        _
      %p175 = scmp.le.s32.totalorder 1, %s17
      %p176 = scmp.lt.s32.totalorder %s17, 3
      %p177 = pnand %p175, %p176
      %p178 = pneg %p177
      // Predicated region
      $region25: #{tpu_custom_call.1} parent=5 // pred_check
        _
      $region26: #{tpu_custom_call.1} parent=5 // pred_check_branch
        %180 = sbr.rel (%p177) target = $region28
      $region27: #{tpu_custom_call.1} parent=5 // pred_region
        %s181 = ssub.s32 %s17, 1
        %s182 = sand.u32 %s44, 1
        %s183 = scalar_lea.sflag [#allocation3], %s182
        %s184 = sand.u32 %s44, 1
        %s185 = smul.addr %s184, 8
        %s186 = scalar_lea.vmem [#allocation2], %s185
        // Predicated region
        $region29: #{tpu_custom_call.1} parent=27 // pred_check
          %p187 = pneg %p57
        $region30: #{tpu_custom_call.1} parent=27 // pred_check_branch
          %189 = sbr.rel (%p187) target = $region32
        $region31: #{tpu_custom_call.1} parent=27 // pred_region
          %191 = dma.done %s183, 128
        $region32: #{tpu_custom_call.1} parent=27 // pred_fallthru
          _
        %s192 = sand.u32 %s72, 1
        %s193 = scalar_lea.sflag [#allocation6], %s192
        %s194 = sand.u32 %s72, 1
        %s195 = smul.addr %s194, 2
        %s196 = scalar_lea.vmem [#allocation5], %s195
        // Predicated region
        $region33: #{tpu_custom_call.1} parent=27 // pred_check
          %p197 = pneg %p85
        $region34: #{tpu_custom_call.1} parent=27 // pred_check_branch
          %199 = sbr.rel (%p197) target = $region36
        $region35: #{tpu_custom_call.1} parent=27 // pred_region
          %201 = dma.done %s193, 32
        $region36: #{tpu_custom_call.1} parent=27 // pred_fallthru
          _
        %s202 = sand.u32 %s44, 1
        %s203 = scalar_lea.sflag [#allocation3], %s202
        %s204 = sand.u32 %s44, 1
        %s205 = smul.addr %s204, 8
        %s206 = scalar_lea.vmem [#allocation2], %s205
        %p207 = pneg %p57
        %p208 = pneg %p54
        %s209 = sand.u32 %s72, 1
        %s210 = scalar_lea.sflag [#allocation6], %s209
        %s211 = sand.u32 %s72, 1
        %s212 = smul.addr %s211, 2
        %s213 = scalar_lea.vmem [#allocation5], %s212
        %p214 = pneg %p85
        %p215 = pneg %p82
        %p216 = pneg %p113
        %p217 = pneg %p110
        %s218 = sand.u32 %s100, 1
        %s219 = scalar_lea.sflag [#allocation4], %s218
        %s220 = sand.u32 %s100, 1
        %s221 = scalar_lea.vmem [#allocation7], %s220
        %s222 = smul.u32 2, %s27
        %s223 = smul.u32 2, %s27
        %v224 = vld [vmem:[%s186] sm:$0xff]
        %v225 = vld [vmem:[%s196] sm:$0x3]
        %227 = vst [vmem:[#allocation1] ss:$2 sm:$0xff] %v224
        %v228 = vld.sshfl [vmem:[#allocation1] sm:$0xff pattern:$0x75316420]
        %v229 = vld.sshfl [vmem:[#allocation1 + $0x8] sm:$0xff pattern:$0x75316420]
        %vm232 = vcmask 1043456
        %v233 = vsel %vm232, %v228, -inf
        %v234 = vrot.slane %v233, 4
        %v235 = vmax.f32 %v233, %v234
        %v236 = vrot.slane %v235, 2
        %v237 = vmax.f32 %v235, %v236
        %v238 = vrot.slane %v237, 1
        %v239 = vmax.f32 %v237, %v238
        %v240 = vsel %vm232, %v229, -inf
        %v241 = vrot.slane %v240, 4
        %v242 = vmax.f32 %v240, %v241
        %v243 = vrot.slane %v242, 2
        %v244 = vmax.f32 %v242, %v243
        %v245 = vrot.slane %v244, 1
        %v246 = vmax.f32 %v244, %v245
        %v249 = vrot.slane %v246, 4
        %v250 = vsel %vm232, %v239, %v249
        %v252 = vsub.f32 %v224, %v250
        %v253 = vmul.f32 %v252, 1.442695
        %v254 = vpow.pop %v253
        %256 = vst [vmem:[#allocation1] ss:$2 sm:$0xff] %v254
        %v257 = vld.sshfl [vmem:[#allocation1] sm:$0xff pattern:$0x75316420]
        %v258 = vld.sshfl [vmem:[#allocation1 + $0x8] sm:$0xff pattern:$0x75316420]
        %v261 = vsel %vm232, %v257, 0.0
        %v262 = vrot.slane %v261, 4
        %v263 = vadd.f32 %v261, %v262
        %v264 = vrot.slane %v263, 2
        %v265 = vadd.f32 %v263, %v264
        %v266 = vrot.slane %v265, 1
        %v267 = vadd.f32 %v265, %v266
        %v268 = vsel %vm232, %v258, 0.0
        %v269 = vrot.slane %v268, 4
        %v270 = vadd.f32 %v268, %v269
        %v271 = vrot.slane %v270, 2
        %v272 = vadd.f32 %v270, %v271
        %v273 = vrot.slane %v272, 1
        %v274 = vadd.f32 %v272, %v273
        %v275 = vlog2.pop %v267
        %v276 = vmul.f32 %v275, 0.6931472
        %v277 = vlog2.pop %v274
        %v278 = vmul.f32 %v277, 0.6931472
        %v279 = vadd.f32 %v276, %v239
        %v280 = vadd.f32 %v278, %v246
        %v281 = vlaneseq
        %v282 = vshrl.u32 %v281, 7
        %v283 = vperm.slane %v225, 0
        %v284 = vperm.slane %v225, 1
        %vm285 = vcmp.eq.s32.totalorder %v282, %v283
        %vm286 = vcmp.eq.s32.totalorder %v282, %v284
        %287 = vst [vmem:[#allocation1] ss:$2 sm:$0xff] %v224
        %v288 = vld.sshfl [vmem:[#allocation1] sm:$0xff pattern:$0x75316420]
        %v289 = vld.sshfl [vmem:[#allocation1 + $0x8] sm:$0xff pattern:$0x75316420]
        %v292 = vsel %vm285, %v288, 0.0
        %v293 = vsel %vm286, %v289, 0.0
        %v294 = vsel %vm232, %v292, 0.0
        %v295 = vrot.slane %v294, 4
        %v296 = vadd.f32 %v294, %v295
        %v297 = vrot.slane %v296, 2
        %v298 = vadd.f32 %v296, %v297
        %v299 = vrot.slane %v298, 1
        %v300 = vadd.f32 %v298, %v299
        %v301 = vsel %vm232, %v293, 0.0
        %v302 = vrot.slane %v301, 4
        %v303 = vadd.f32 %v301, %v302
        %v304 = vrot.slane %v303, 2
        %v305 = vadd.f32 %v303, %v304
        %v306 = vrot.slane %v305, 1
        %v307 = vadd.f32 %v305, %v306
        %v308 = vsub.f32 %v279, %v300
        %v309 = vsub.f32 %v280, %v307
        %vm310 = vcmp.ne.s32.totalorder %v225, 255
        %v313 = vrot.slane %v309, 7
        %vm314 = vcmask 1040384
        %v315 = vsel %vm314, %v308, %v313
        %v317 = vsel %vm310, %v315, 0.0
        %v319 = vperm.slane %v317, 0
        %v320 = vperm.slane %v317, 1
        %v323 = vsel %vm314, %v319, 0.0
        %v324 = vsel %vm314, %v320, 0.0
        %v325 = vadd.f32 %v323, %v324
        %326 = vadd.xlane.f32.xlu0 %v325
        %v327 = vpop.xlane.xlu0 %326
        %v328 = vrot.slane %v327, 4
        %v329 = vadd.f32 %v327, %v328
        %v330 = vrot.slane %v329, 2
        %v331 = vadd.f32 %v329, %v330
        %v332 = vrot.slane %v331, 1
        %v333 = vadd.f32 %v331, %v332
        %s334 = vtos %v333
        %v335 = vlaneseq
        %v336 = vand.u32 %v335, 127
        %vm337 = vcmp.eq.s32.totalorder %v336, 0
        %v338 = vstv %s334
        %v339 = vsel %vm337, %v338, 0.0
        %340 = vst [vmem:[%s221] sm:$0x1] %v339
        %s341 = sand.u32 %s100, 1
        %s342 = scalar_lea.sflag [#allocation4], %s341
        %s343 = sand.u32 %s100, 1
        %s344 = scalar_lea.vmem [#allocation7], %s343
        // Predicated region
        $region37: #{tpu_custom_call.1} parent=27 // pred_check
          %p345 = pneg %p110
        $region38: #{tpu_custom_call.1} parent=27 // pred_check_branch
          %347 = sbr.rel (%p345) target = $region40
        $region39: #{tpu_custom_call.1} parent=27 // pred_region
          %349 = vsyncadd %s342, 0
          %s350 = sadd.s32 %s27, %s26
          %s351 = scalar_lea.hbm %s2, %s350
          %s353 = sshll.u32 %s344, 4
          %s354 = int_to_ptr.vmem [resolvable:$true] %s353
          %s355 = sshll.u32 %s351, 4
          %s356 = int_to_ptr.hbm [resolvable:$true] %s355
          %358 = dma.vmem_to_hbm [thread:$0]  %s354, 16, %s356, %s342
        $region40: #{tpu_custom_call.1} parent=27 // pred_fallthru
          _
      $region28: #{tpu_custom_call.1} parent=5 // pred_fallthru
        _
      %p359 = scmp.le.s32.totalorder 2, %s17
      // Predicated region
      $region41: #{tpu_custom_call.1} parent=5 // pred_check
        %p360 = pneg %p359
      $region42: #{tpu_custom_call.1} parent=5 // pred_check_branch
        %362 = sbr.rel (%p360) target = $region44
      $region43: #{tpu_custom_call.1} parent=5 // pred_region
        %s363 = ssub.s32 %s17, 2
        // Predicated region
        $region45: #{tpu_custom_call.1} parent=43 // pred_check
          %p364 = pneg %p116
        $region46: #{tpu_custom_call.1} parent=43 // pred_check_branch
          %366 = sbr.rel (%p364) target = $region48
        $region47: #{tpu_custom_call.1} parent=43 // pred_region
          %s367 = sand.u32 %s101, 1
          %s368 = scalar_lea.sflag [#allocation4], %s367
          %s369 = sand.u32 %s101, 1
          %s370 = scalar_lea.vmem [#allocation7], %s369
          %372 = dma.done %s368, 16
        $region48: #{tpu_custom_call.1} parent=43 // pred_fallthru
          _
      $region44: #{tpu_custom_call.1} parent=5 // pred_fallthru
        _
    $region6: #{tpu_custom_call.1} parent=1 // loop_footer
      %s21 = sadd.s32 1, %s17
    $region7: #{tpu_custom_call.1} parent=1 // loop_footer_branch
      %16 = sbr.rel target = $region3
    $region8: #{tpu_custom_call.1} parent=1 // loop_exit
      _
    %373 = vsyncpa [#allocation3], 1
    %s374 = scalar_lea.sflag [#allocation3], 1
    %375 = vsyncpa %s374, 1
    %376 = vsyncpa [#allocation6], 1
    %s377 = scalar_lea.sflag [#allocation6], 1
    %378 = vsyncpa %s377, 1
    %379 = vsyncpa [#allocation4], 1
    %s380 = scalar_lea.sflag [#allocation4], 1
    %381 = vsyncpa %s380, 1

</llo_original>
